<compile_context>
chip_gen: v7x
topology: tpu7x:2x2x1
jax: 0.10.0
libtpu: 0.0.40
codegen_flags: <defaults>
</compile_context>

<pallas_src>
import math

import jax
import jax.numpy as jnp
from jax.experimental import pallas as pl
from jax.experimental.pallas import tpu as pltpu

_LANES = 128
_SUBLANES = 8
_DEFAULT_BLOCK_BYTES = 1 << 20   # ~1 MiB per x block (HBM-roofline sweet spot)
_FAST_PATH_BYTES = 1 << 20       # below this, skip pallas entirely


def _build_pe(d_model: int, max_len: int = 200) -> jnp.ndarray:
    """Sinusoidal positional-encoding buffer, shape (1, max_len, d_model)."""
    position = jnp.arange(0, max_len, dtype=jnp.float32)[:, None]
    div_term = jnp.exp(
        jnp.arange(0, d_model, 2, dtype=jnp.float32) * (-math.log(10000.0) / d_model)
    )
    pe = jnp.zeros((max_len, d_model), dtype=jnp.float32)
    pe = pe.at[:, 0::2].set(jnp.sin(position * div_term))
    pe = pe.at[:, 1::2].set(jnp.cos(position * div_term[: d_model // 2]))
    return pe[None, :, :]


def _pe_add_kernel(x_ref, pe_ref, o_ref):
    # x_ref: (bB, rT, 128) block of x; pe_ref: (1, rT, 128) broadcast over batch.
    o_ref[...] = (x_ref[...] + pe_ref[...]).astype(o_ref.dtype)


def _choose_tiles(B: int, R: int, itemsize: int, target_bytes: int):
    """Bytes-driven block shape (bB, rT) for blocks of (bB, rT, 128)."""
    row_bytes = R * _LANES * itemsize
    if row_bytes <= target_bytes:
        # One batch row fits: fuse batch rows up to the byte target.
        bB = max(1, min(B, target_bytes // max(row_bytes, 1)))
        rT = R
    else:
        # Row too big: tile the flattened row axis; rT multiple of 8 (sublane rule).
        bB = 1
        rT = (target_bytes // (_LANES * itemsize)) // _SUBLANES * _SUBLANES
        rT = max(_SUBLANES, min(rT, R))
    return bB, rT


def positional_encoding_forward(
    x: jnp.ndarray,
    pe: jnp.ndarray,
    *,
    target_block_bytes: int = _DEFAULT_BLOCK_BYTES,
    min_pallas_bytes: int = _FAST_PATH_BYTES,
) -> jnp.ndarray:
    """x: (B, S, D); pe: (1, max_len, D). Returns x + pe[:, :S]."""
    B, S, D = x.shape
    assert pe.shape[0] == 1 and pe.shape[2] == D and S <= pe.shape[1]

    # Pre-slice pe (never DMA the unused max_len tail) and match x's dtype.
    pe_s = pe[:, :S, :].astype(x.dtype)

    # Tiny inputs: launch + per-step overhead dwarfs the memcpy; use XLA's fused add.
    if x.size * x.dtype.itemsize < min_pallas_bytes:
        return x + pe_s

    # Lane-dense view: flatten (S, D) and pad up to a multiple of 128 lanes so the
    # kernel always writes full vregs (unmasked stores). Pad is stripped afterwards.
    n = S * D
    R = pl.cdiv(n, _LANES)
    pad = R * _LANES - n
    x_flat = x.reshape(B, n)
    pe_flat = pe_s.reshape(1, n)
    if pad:
        x_flat = jnp.pad(x_flat, ((0, 0), (0, pad)))
        pe_flat = jnp.pad(pe_flat, ((0, 0), (0, pad)))
    x_v = x_flat.reshape(B, R, _LANES)
    pe_v = pe_flat.reshape(1, R, _LANES)

    bB, rT = _choose_tiles(B, R, x.dtype.itemsize, target_block_bytes)
    nb = pl.cdiv(B, bB)
    nr = pl.cdiv(R, rT)

    out = pl.pallas_call(
        _pe_add_kernel,
        out_shape=jax.ShapeDtypeStruct((B, R, _LANES), x.dtype),
        grid_spec=pltpu.PrefetchScalarGridSpec(
            num_scalar_prefetch=0,
            # batch innermost: pe's block index is constant across it, so its DMA
            # is skipped whenever the block doesn't change.
            grid=(nr, nb),
            in_specs=[
                pl.BlockSpec((bB, rT, _LANES), lambda r, b: (b, r, 0)),
                pl.BlockSpec((1, rT, _LANES), lambda r, b: (0, r, 0)),
            ],
            out_specs=pl.BlockSpec((bB, rT, _LANES), lambda r, b: (b, r, 0)),
        ),
        compiler_params=pltpu.CompilerParams(
            dimension_semantics=("parallel", "parallel"),
        ),
        # TODO(synk): could donate x via input_output_aliases={0: 0} to cut peak HBM
        # footprint; omitted so callers may keep using x after the call.
    )(x_v, pe_v)

    out = out.reshape(B, R * _LANES)
    if pad:
        out = out[:, :n]
    return out.reshape(B, S, D)


if __name__ == "__main__":
    key = jax.random.PRNGKey(0)

    # --- Primary demo: shapes consistent with the module (batch=2, seq=8, d_model=32)
    B, S, D, MAX_LEN = 2, 8, 32, 200
    x = jax.random.normal(key, (B, S, D), dtype=jnp.float32)
    pe = _build_pe(D, MAX_LEN)

    # Force the Pallas kernel to run on the small demo shape (bypass fast path).
    out = positional_encoding_forward(x, pe, min_pallas_bytes=0)
    out = jax.block_until_ready(out)
    ref = x + pe[:, :S]
    assert out.shape == (B, S, D)
    assert jnp.allclose(out, ref, atol=1e-6), "mismatch vs reference (main)"

    # Default wrapper on the same shape takes the plain-JAX fast path.
    out_fast = jax.block_until_ready(positional_encoding_forward(x, pe))
    assert jnp.allclose(out_fast, ref, atol=1e-6), "mismatch vs reference (fast path)"

    # --- Pad path + batch edge block: S*D not a multiple of 128, B not divisible by bB.
    B2, S2, D2 = 3, 8, 40
    x2 = jax.random.normal(jax.random.PRNGKey(1), (B2, S2, D2), dtype=jnp.float32)
    pe2 = _build_pe(D2, MAX_LEN)
    out2 = jax.block_until_ready(
        positional_encoding_forward(x2, pe2, target_block_bytes=4096, min_pallas_bytes=0)
    )
    assert jnp.allclose(out2, x2 + pe2[:, :S2], atol=1e-6), "mismatch (pad/edge path)"

    # --- R-axis tiling path: one batch row exceeds the (artificially small) target.
    B3, S3, D3 = 2, 64, 128
    x3 = jax.random.normal(jax.random.PRNGKey(2), (B3, S3, D3), dtype=jnp.float32)
    pe3 = _build_pe(D3, MAX_LEN)
    out3 = jax.block_until_ready(
        positional_encoding_forward(x3, pe3, target_block_bytes=8192, min_pallas_bytes=0)
    )
    assert jnp.allclose(out3, x3 + pe3[:, :S3], atol=1e-6), "mismatch (R-tiling path)"

    print("KERNEL_OK")
</pallas_src>

<mosaic_0001>
module attributes {stable_mosaic.version = 11 : i64} {
  func.func @_pe_add_kernel(%arg0: i32, %arg1: i32, %arg2: memref<2x2x128xf32, #tpu.memory_space<vmem>>, %arg3: memref<1x2x128xf32, #tpu.memory_space<vmem>>, %arg4: memref<2x2x128xf32, #tpu.memory_space<vmem>>) attributes {dimension_semantics = [#tpu.dimension_semantics<parallel>, #tpu.dimension_semantics<parallel>], iteration_bounds = array<i64: 1, 1>, scalar_prefetch = 0 : i64, scratch_operands = 0 : i64, tpu.core_type = #tpu.core_type<tc>, window_params = [{transform_indices = @transform_0, window_bounds = array<i64: 2, 2, 128>}, {transform_indices = @transform_1, window_bounds = array<i64: 1, 2, 128>}, {transform_indices = @transform_2, window_bounds = array<i64: 2, 2, 128>}]} {
    %c0 = arith.constant 0 : index
    %c0_0 = arith.constant 0 : index
    %c0_1 = arith.constant 0 : index
    %0 = vector.load %arg2[%c0, %c0_0, %c0_1] : memref<2x2x128xf32, #tpu.memory_space<vmem>>, vector<2x2x128xf32>
    %c0_2 = arith.constant 0 : index
    %c0_3 = arith.constant 0 : index
    %c0_4 = arith.constant 0 : index
    %1 = vector.load %arg3[%c0_2, %c0_3, %c0_4] : memref<1x2x128xf32, #tpu.memory_space<vmem>>, vector<1x2x128xf32>
    %2 = vector.broadcast %1 : vector<1x2x128xf32> to vector<2x2x128xf32>
    %3 = arith.addf %0, %2 : vector<2x2x128xf32>
    %c0_5 = arith.constant 0 : index
    %c0_6 = arith.constant 0 : index
    %c0_7 = arith.constant 0 : index
    %4 = vector.load %arg4[%c0_5, %c0_6, %c0_7] : memref<2x2x128xf32, #tpu.memory_space<vmem>>, vector<2x2x128xf32>
    tpu.vector_store %arg4[%c0_5, %c0_6, %c0_7], %3 {strides = array<i32>} : memref<2x2x128xf32, #tpu.memory_space<vmem>>, vector<2x2x128xf32>,
    return
  }
  func.func @transform_0(%arg0: i32, %arg1: i32) -> (i32, i32, i32) {
    %c0_i32 = arith.constant 0 : i32
    %c0_i32_0 = arith.constant 0 : i32
    return %arg1, %arg0, %c0_i32 : i32, i32, i32
  }
  func.func @transform_1(%arg0: i32, %arg1: i32) -> (i32, i32, i32) {
    %c0_i32 = arith.constant 0 : i32
    %c0_i32_0 = arith.constant 0 : i32
    %c0_i32_1 = arith.constant 0 : i32
    return %c0_i32, %arg0, %c0_i32_0 : i32, i32, i32
  }
  func.func @transform_2(%arg0: i32, %arg1: i32) -> (i32, i32, i32) {
    %c0_i32 = arith.constant 0 : i32
    %c0_i32_0 = arith.constant 0 : i32
    return %arg1, %arg0, %c0_i32 : i32, i32, i32
  }
}

</mosaic_0001>

<llo_original>
// kernel: tpu_custom_call.1
$region0: #{tpu_custom_call.1}
  #allocation0 [shape = 'u32[]', space=smem, size = 0x4, offset = 0x4, fixed_abs, tag = 'smem constant byte address 0x4 - core index']
  #allocation1 [shape = 'u32[144,128]{1,0:T(1,128)}', space=vmem, size = 0x12000, scoped, tag = 'internal scratch']
  %s0 = inlined_call_operand.hbm [shape: f32[2,2,128], index: 0, kind: input, shape index: {}]
  %s1 = inlined_call_operand.vmem [shape: f32[1,2,128], index: 1, kind: input, shape index: {}]
  %s2 = inlined_call_operand.hbm [shape: f32[2,2,128], index: 2, kind: output, shape index: {}]
  %s3 = sld [smem:[#allocation0]]
  $region22: #{tpu_custom_call.1} parent=0
    _
  %s5 = ssub.s32 1, %s3
  %s6 = scalar_select 0, %s5, %s3
  $region1: #{tpu_custom_call.1} parent=0
    #allocation2 [shape = 'u8[2048]{0}', space=vmem, size = 0x800, scoped, tag = 'input window, operand 0, single buffered']
    #allocation3 [shape = 's32[1]{0}', space=sflag, size = 0x4, scoped, tag = 'scoped memory for tpu_custom_call.1']
    #allocation4 [shape = 's32[1]{0}', space=sflag, size = 0x4, scoped, tag = 'scoped memory for tpu_custom_call.1']
    #allocation5 [shape = 'u8[2048]{0}', space=vmem, size = 0x800, scoped, tag = 'output window, operand 0, single buffered']
    %7 = vsyncpa [#allocation3], 0
    %8 = vsyncpa [#allocation4], 0
    // Predicated region
    $region2: #{tpu_custom_call.1} parent=1 // pred_check
      _
    $region3: #{tpu_custom_call.1} parent=1 // pred_check_branch
      %10 = sbr.rel (0) target = $region5
    $region4: #{tpu_custom_call.1} parent=1 // pred_region
      %s12 = ssub.s32 64, 64
      %13 = vsyncadd [#allocation3], %s12
      %s14 = sshll.u32 [#allocation2], 4
      %s15 = int_to_ptr.vmem [resolvable:$true] %s14
      %20 = dma.hbm_to_vmem [thread:$0]  %s0, 64, %s15, [#allocation3], 32, 32, 2
    $region5: #{tpu_custom_call.1} parent=1 // pred_fallthru
      _
    // Predicated region
    $region6: #{tpu_custom_call.1} parent=1 // pred_check
      _
    $region7: #{tpu_custom_call.1} parent=1 // pred_check_branch
      %22 = sbr.rel (0) target = $region9
    $region8: #{tpu_custom_call.1} parent=1 // pred_region
      _
    $region9: #{tpu_custom_call.1} parent=1 // pred_fallthru
      _
    // Predicated region
    $region10: #{tpu_custom_call.1} parent=1 // pred_check
      _
    $region11: #{tpu_custom_call.1} parent=1 // pred_check_branch
      %24 = sbr.rel (0) target = $region13
    $region12: #{tpu_custom_call.1} parent=1 // pred_region
      %25 = dma.done [#allocation3], 64
    $region13: #{tpu_custom_call.1} parent=1 // pred_fallthru
      _
    %v26 = vld [vmem:[#allocation2] sm:$0x3]
    %v27 = vld [vmem:[#allocation2 + $0x2] sm:$0x3]
    %v28 = vld [vmem:[%s1] sm:$0x3]
    %v29 = vadd.f32 %v26, %v28
    %v30 = vadd.f32 %v27, %v28
    %31 = vst [vmem:[#allocation5] sm:$0x3] %v29
    %32 = vst [vmem:[#allocation5 + $0x2] sm:$0x3] %v30
    // Predicated region
    $region14: #{tpu_custom_call.1} parent=1 // pred_check
      _
    $region15: #{tpu_custom_call.1} parent=1 // pred_check_branch
      %34 = sbr.rel (0) target = $region17
    $region16: #{tpu_custom_call.1} parent=1 // pred_region
      %s36 = ssub.s32 64, 64
      %37 = vsyncadd [#allocation4], %s36
      %s38 = sshll.u32 [#allocation5], 4
      %s39 = int_to_ptr.vmem [resolvable:$true] %s38
      %44 = dma.vmem_to_hbm [thread:$0]  %s39, 64, %s2, [#allocation4], 32, 32, 2
    $region17: #{tpu_custom_call.1} parent=1 // pred_fallthru
      _
    // Predicated region
    $region18: #{tpu_custom_call.1} parent=1 // pred_check
      _
    $region19: #{tpu_custom_call.1} parent=1 // pred_check_branch
      %46 = sbr.rel (0) target = $region21
    $region20: #{tpu_custom_call.1} parent=1 // pred_region
      %47 = dma.done [#allocation4], 64
    $region21: #{tpu_custom_call.1} parent=1 // pred_fallthru
      _
    %48 = vsyncpa [#allocation3], 1
    %49 = vsyncpa [#allocation4], 1

</llo_original>
